<compile_context>
chip_gen: v7x
topology: tpu7x:2x2x1
jax: 0.10.0
libtpu: 0.0.40
codegen_flags: <defaults>
</compile_context>

<pallas_src>
import functools

import jax
import jax.numpy as jnp
from jax.experimental import pallas as pl
from jax.experimental.pallas import tpu as pltpu

EPS = 1e-5


def _round_up(n, m):
    return ((n + m - 1) // m) * m


def _mlp_kernel(x_ref, w0_ref, b0_ref, w1_ref, b1_ref, w2_ref, b2_ref, o_ref):
    """relu(x @ w0 + b0) -> relu(. @ w1 + b1) -> . @ w2 + b2 for one batch tile.

    BatchNorm is already folded into (w0, b0). Weights arrive in the MXU dtype
    (bf16 by default); activations are cast per matmul; accumulation is f32.
    """
    mxu_dtype = w0_ref.dtype

    h = jnp.dot(x_ref[...].astype(mxu_dtype), w0_ref[...],
                preferred_element_type=jnp.float32)
    h = jnp.maximum(h + b0_ref[...], 0.0)                       # dropout(p=0) == identity

    h = jnp.dot(h.astype(mxu_dtype), w1_ref[...],
                preferred_element_type=jnp.float32)
    h = jnp.maximum(h + b1_ref[...], 0.0)

    o_ref[...] = (jnp.dot(h.astype(mxu_dtype), w2_ref[...],
                          preferred_element_type=jnp.float32)
                  + b2_ref[...])                                # final layer: no activation


def fc_network_with_batchnorm(x, gamma, beta, w0, b0, w1, b1, w2, b2,
                              *, tile_b=1024, mxu_dtype=jnp.bfloat16):
    """x: (B, obs_dim) float32. Returns (B, act_dim) float32."""
    B, obs_dim = x.shape
    h0_dim = w0.shape[1]
    h1_dim = w1.shape[1]
    act_dim = w2.shape[1]

    # ---- BatchNorm1d training-mode statistics over the FULL batch, hoisted out of the
    # tiled kernel (required for correctness once the batch is tiled; also lets the grid
    # be parallel). Single pass: E[x], E[x^2] -> biased variance.
    mean = jnp.mean(x, axis=0, keepdims=True)                       # (1, obs_dim)
    mean_sq = jnp.mean(jnp.square(x), axis=0, keepdims=True)        # (1, obs_dim)
    var = jnp.maximum(mean_sq - jnp.square(mean), 0.0)              # biased (training mode)
    scale = gamma * jax.lax.rsqrt(var + EPS)                        # (1, obs_dim)
    shift = beta - mean * scale                                     # (1, obs_dim)

    # ---- Fold BN into the first Linear:
    # relu((x*scale + shift) @ w0 + b0) == relu(x @ (scale.T * w0) + (shift @ w0 + b0))
    w0_eff = scale.reshape(-1, 1) * w0                              # (obs_dim, h0)
    b0_eff = shift @ w0 + b0                                        # (1, h0)

    # ---- Lane-dense output: pad act_dim up to a multiple of 128 with zero columns.
    act_pad = _round_up(act_dim, 128)
    w2_p = jnp.zeros((h1_dim, act_pad), w2.dtype).at[:, :act_dim].set(w2)
    b2_p = jnp.zeros((1, act_pad), jnp.float32).at[:, :act_dim].set(b2)

    # ---- MXU operands in bf16 (weights cast once here); biases stay f32.
    w0_eff = w0_eff.astype(mxu_dtype)
    w1_c = w1.astype(mxu_dtype)
    w2_p = w2_p.astype(mxu_dtype)
    b0_eff = b0_eff.astype(jnp.float32)
    b1_c = b1.astype(jnp.float32)

    # ---- Batch tiling: largest tile that comfortably double-buffers on every gen.
    # VMEM use ~= 2*(tile_b x obs_dim x 4B) [x] + 2*(tile_b x act_pad x 4B) [out]
    #            + resident weights (~30 KiB)  ->  ~1.2 MiB at tile_b=1024.
    tile_b = min(tile_b, _round_up(B, 8))
    tile_b = _round_up(tile_b, 8)
    grid = (pl.cdiv(B, tile_b),)

    resident = lambda i: (0, 0)   # weights/biases: same block every step -> stay in VMEM

    out_padded = pl.pallas_call(
        _mlp_kernel,
        out_shape=jax.ShapeDtypeStruct((B, act_pad), jnp.float32),
        grid=grid,
        in_specs=[
            pl.BlockSpec((tile_b, obs_dim), lambda i: (i, 0)),   # x: streamed batch tiles
            pl.BlockSpec((obs_dim, h0_dim), resident),           # w0 (BN-folded)
            pl.BlockSpec((1, h0_dim), resident),                 # b0 (BN-folded)
            pl.BlockSpec((h0_dim, h1_dim), resident),            # w1
            pl.BlockSpec((1, h1_dim), resident),                 # b1
            pl.BlockSpec((h1_dim, act_pad), resident),           # w2 (zero-padded cols)
            pl.BlockSpec((1, act_pad), resident),                # b2 (zero-padded cols)
        ],
        out_specs=pl.BlockSpec((tile_b, act_pad), lambda i: (i, 0)),
        compiler_params=pltpu.CompilerParams(
            dimension_semantics=("parallel",),                   # megacore-splittable batch axis
            vmem_limit_bytes=32 * 1024 * 1024,                   # well inside v7x's 64 MiB
        ),
    )(x, w0_eff, b0_eff, w1_c, b1_c, w2_p, b2_p)

    return out_padded[:, :act_dim]


def init_params(key, obs_dim, act_dim, hidden_sizes=(64, 64)):
    """Deterministic parameter init mimicking nn.Linear's uniform(-1/sqrt(fan_in), +)."""
    layer_sizes = (obs_dim,) + hidden_sizes + (act_dim,)
    params = []
    for i in range(len(layer_sizes) - 1):
        fan_in, fan_out = layer_sizes[i], layer_sizes[i + 1]
        key, kw, kb = jax.random.split(key, 3)
        bound = 1.0 / jnp.sqrt(fan_in)
        # stored as (in, out) = PyTorch weight.T
        w = jax.random.uniform(kw, (fan_in, fan_out), jnp.float32, -bound, bound)
        b = jax.random.uniform(kb, (1, fan_out), jnp.float32, -bound, bound)
        params.append((w, b))
    # BatchNorm1d affine params: gamma=1, beta=0 at init
    gamma = jnp.ones((1, obs_dim), jnp.float32)
    beta = jnp.zeros((1, obs_dim), jnp.float32)
    return gamma, beta, params


def reference_forward(x, gamma, beta, params):
    """Pure-JAX f32 reference for the PyTorch module's training-mode forward."""
    mean = jnp.mean(x, axis=0, keepdims=True)
    var = jnp.mean(jnp.square(x - mean), axis=0, keepdims=True)
    out = (x - mean) / jnp.sqrt(var + EPS) * gamma + beta
    for w, b in params[:-1]:
        out = jnp.maximum(out @ w + b, 0.0)
    w, b = params[-1]
    return out @ w + b


# TODO(synk): nn.BatchNorm1d running_mean/running_var momentum updates and the
# TensorBoard/forward-hook logging are training/debug state with no Pallas equivalent.

if __name__ == "__main__":
    obs_dim, act_dim, hidden = 16, 8, (64, 64)
    batch = 256

    key = jax.random.PRNGKey(0)
    key, kx = jax.random.split(key)
    x = jax.random.normal(kx, (batch, obs_dim), jnp.float32)

    gamma, beta, params = init_params(key, obs_dim, act_dim, hidden)
    (w0, b0), (w1, b1), (w2, b2) = params

    # tile_b=64 -> grid of 4 batch tiles, exercising the pipelined/parallel grid.
    # jit fuses the stats pass / BN-fold / pallas_call / final slice into one executable.
    fwd = jax.jit(functools.partial(fc_network_with_batchnorm, tile_b=64))
    out = fwd(x, gamma, beta, w0, b0, w1, b1, w2, b2)
    out = jax.block_until_ready(out)

    ref = reference_forward(x, gamma, beta, params)
    assert out.shape == (batch, act_dim)
    # bf16 MXU operands -> slightly looser tolerance than pure-f32.
    assert jnp.allclose(out, ref, atol=2e-2, rtol=2e-2), "mismatch vs JAX reference"

    print("KERNEL_OK")
</pallas_src>

<mosaic_0001>
module attributes {stable_mosaic.version = 11 : i64} {
  func.func @_mlp_kernel(%arg0: i32, %arg1: memref<64x16xf32, #tpu.memory_space<vmem>>, %arg2: memref<16x64xbf16, #tpu.memory_space<vmem>>, %arg3: memref<1x64xf32, #tpu.memory_space<vmem>>, %arg4: memref<64x64xbf16, #tpu.memory_space<vmem>>, %arg5: memref<1x64xf32, #tpu.memory_space<vmem>>, %arg6: memref<64x128xbf16, #tpu.memory_space<vmem>>, %arg7: memref<1x128xf32, #tpu.memory_space<vmem>>, %arg8: memref<64x128xf32, #tpu.memory_space<vmem>>) attributes {dimension_semantics = [#tpu.dimension_semantics<parallel>], iteration_bounds = array<i64: 4>, scalar_prefetch = 0 : i64, scratch_operands = 0 : i64, tpu.core_type = #tpu.core_type<tc>, window_params = [{transform_indices = @transform_0, window_bounds = array<i64: 64, 16>}, {pipeline_mode = #tpu.pipeline_mode<synchronous>, transform_indices = @transform_1, window_bounds = array<i64: 16, 64>}, {pipeline_mode = #tpu.pipeline_mode<synchronous>, transform_indices = @transform_2, window_bounds = array<i64: 1, 64>}, {pipeline_mode = #tpu.pipeline_mode<synchronous>, transform_indices = @transform_3, window_bounds = array<i64: 64, 64>}, {pipeline_mode = #tpu.pipeline_mode<synchronous>, transform_indices = @transform_4, window_bounds = array<i64: 1, 64>}, {pipeline_mode = #tpu.pipeline_mode<synchronous>, transform_indices = @transform_5, window_bounds = array<i64: 64, 128>}, {pipeline_mode = #tpu.pipeline_mode<synchronous>, transform_indices = @transform_6, window_bounds = array<i64: 1, 128>}, {transform_indices = @transform_7, window_bounds = array<i64: 64, 128>}]} {
    %c0 = arith.constant 0 : index
    %c0_0 = arith.constant 0 : index
    %0 = vector.load %arg1[%c0, %c0_0] : memref<64x16xf32, #tpu.memory_space<vmem>>, vector<64x16xf32>
    %1 = arith.truncf %0 : vector<64x16xf32> to vector<64x16xbf16>
    %c0_1 = arith.constant 0 : index
    %c0_2 = arith.constant 0 : index
    %2 = vector.load %arg2[%c0_1, %c0_2] : memref<16x64xbf16, #tpu.memory_space<vmem>>, vector<16x64xbf16>
    %cst = arith.constant dense<0.000000e+00> : vector<64x64xf32>
    %3 = tpu.matmul %1, %2, %cst {dimension_numbers = #tpu.dot_dimension_numbers<[1], [0], [0], [1], [0, 0, 1, 1], [], []>} : vector<64x16xbf16>, vector<16x64xbf16>, vector<64x64xf32> -> vector<64x64xf32>
    %c0_3 = arith.constant 0 : index
    %c0_4 = arith.constant 0 : index
    %4 = vector.load %arg3[%c0_3, %c0_4] : memref<1x64xf32, #tpu.memory_space<vmem>>, vector<1x64xf32>
    %5 = vector.broadcast %4 : vector<1x64xf32> to vector<64x64xf32>
    %6 = arith.addf %3, %5 : vector<64x64xf32>
    %cst_5 = arith.constant 0.000000e+00 : f32
    %7 = vector.broadcast %cst_5 : f32 to vector<64x64xf32>
    %8 = arith.maximumf %6, %7 : vector<64x64xf32>
    %9 = arith.truncf %8 : vector<64x64xf32> to vector<64x64xbf16>
    %c0_6 = arith.constant 0 : index
    %c0_7 = arith.constant 0 : index
    %10 = vector.load %arg4[%c0_6, %c0_7] : memref<64x64xbf16, #tpu.memory_space<vmem>>, vector<64x64xbf16>
    %cst_8 = arith.constant dense<0.000000e+00> : vector<64x64xf32>
    %11 = tpu.matmul %9, %10, %cst_8 {dimension_numbers = #tpu.dot_dimension_numbers<[1], [0], [0], [1], [0, 0, 1, 1], [], []>} : vector<64x64xbf16>, vector<64x64xbf16>, vector<64x64xf32> -> vector<64x64xf32>
    %c0_9 = arith.constant 0 : index
    %c0_10 = arith.constant 0 : index
    %12 = vector.load %arg5[%c0_9, %c0_10] : memref<1x64xf32, #tpu.memory_space<vmem>>, vector<1x64xf32>
    %13 = vector.broadcast %12 : vector<1x64xf32> to vector<64x64xf32>
    %14 = arith.addf %11, %13 : vector<64x64xf32>
    %cst_11 = arith.constant 0.000000e+00 : f32
    %15 = vector.broadcast %cst_11 : f32 to vector<64x64xf32>
    %16 = arith.maximumf %14, %15 : vector<64x64xf32>
    %17 = arith.truncf %16 : vector<64x64xf32> to vector<64x64xbf16>
    %c0_12 = arith.constant 0 : index
    %c0_13 = arith.constant 0 : index
    %18 = vector.load %arg6[%c0_12, %c0_13] : memref<64x128xbf16, #tpu.memory_space<vmem>>, vector<64x128xbf16>
    %cst_14 = arith.constant dense<0.000000e+00> : vector<64x128xf32>
    %19 = tpu.matmul %17, %18, %cst_14 {dimension_numbers = #tpu.dot_dimension_numbers<[1], [0], [0], [1], [0, 0, 1, 1], [], []>} : vector<64x64xbf16>, vector<64x128xbf16>, vector<64x128xf32> -> vector<64x128xf32>
    %c0_15 = arith.constant 0 : index
    %c0_16 = arith.constant 0 : index
    %20 = vector.load %arg7[%c0_15, %c0_16] : memref<1x128xf32, #tpu.memory_space<vmem>>, vector<1x128xf32>
    %21 = vector.broadcast %20 : vector<1x128xf32> to vector<64x128xf32>
    %22 = arith.addf %19, %21 : vector<64x128xf32>
    %c0_17 = arith.constant 0 : index
    %c0_18 = arith.constant 0 : index
    %23 = vector.load %arg8[%c0_17, %c0_18] : memref<64x128xf32, #tpu.memory_space<vmem>>, vector<64x128xf32>
    tpu.vector_store %arg8[%c0_17, %c0_18], %22 {strides = array<i32>} : memref<64x128xf32, #tpu.memory_space<vmem>>, vector<64x128xf32>,
    return
  }
  func.func @transform_0(%arg0: i32) -> (i32, i32) {
    %c0_i32 = arith.constant 0 : i32
    %c0_i32_0 = arith.constant 0 : i32
    return %arg0, %c0_i32 : i32, i32
  }
  func.func @transform_1(%arg0: i32) -> (i32, i32) {
    %c0_i32 = arith.constant 0 : i32
    %c0_i32_0 = arith.constant 0 : i32
    %c0_i32_1 = arith.constant 0 : i32
    return %c0_i32, %c0_i32_0 : i32, i32
  }
  func.func @transform_2(%arg0: i32) -> (i32, i32) {
    %c0_i32 = arith.constant 0 : i32
    %c0_i32_0 = arith.constant 0 : i32
    %c0_i32_1 = arith.constant 0 : i32
    return %c0_i32, %c0_i32_0 : i32, i32
  }
  func.func @transform_3(%arg0: i32) -> (i32, i32) {
    %c0_i32 = arith.constant 0 : i32
    %c0_i32_0 = arith.constant 0 : i32
    %c0_i32_1 = arith.constant 0 : i32
    return %c0_i32, %c0_i32_0 : i32, i32
  }
  func.func @transform_4(%arg0: i32) -> (i32, i32) {
    %c0_i32 = arith.constant 0 : i32
    %c0_i32_0 = arith.constant 0 : i32
    %c0_i32_1 = arith.constant 0 : i32
    return %c0_i32, %c0_i32_0 : i32, i32
  }
  func.func @transform_5(%arg0: i32) -> (i32, i32) {
    %c0_i32 = arith.constant 0 : i32
    %c0_i32_0 = arith.constant 0 : i32
    %c0_i32_1 = arith.constant 0 : i32
    return %c0_i32, %c0_i32_0 : i32, i32
  }
  func.func @transform_6(%arg0: i32) -> (i32, i32) {
    %c0_i32 = arith.constant 0 : i32
    %c0_i32_0 = arith.constant 0 : i32
    %c0_i32_1 = arith.constant 0 : i32
    return %c0_i32, %c0_i32_0 : i32, i32
  }
  func.func @transform_7(%arg0: i32) -> (i32, i32) {
    %c0_i32 = arith.constant 0 : i32
    %c0_i32_0 = arith.constant 0 : i32
    return %arg0, %c0_i32 : i32, i32
  }
}

</mosaic_0001>

<llo_original>
// kernel: fc_network_with_batchnorm.1
$region0: #{fc_network_with_batchnorm.1}
  #allocation0 [shape = 'u32[]', space=smem, size = 0x4, offset = 0x4, fixed_abs, tag = 'smem constant byte address 0x4 - core index']
  #allocation1 [shape = 'u32[144,128]{1,0:T(1,128)}', space=vmem, size = 0x12000, scoped, tag = 'internal scratch']
  %s0 = inlined_call_operand.vmem [shape: f32[256,16], index: 0, kind: input, shape index: {}]
  %s1 = inlined_call_operand.vmem [shape: bf16[16,64], index: 1, kind: input, shape index: {}]
  %s2 = inlined_call_operand.vmem [shape: f32[1,64], index: 2, kind: input, shape index: {}]
  %s3 = inlined_call_operand.vmem [shape: bf16[64,64], index: 3, kind: input, shape index: {}]
  %s4 = inlined_call_operand.vmem [shape: f32[1,64], index: 4, kind: input, shape index: {}]
  %s5 = inlined_call_operand.vmem [shape: bf16[64,128], index: 5, kind: input, shape index: {}]
  %s6 = inlined_call_operand.vmem [shape: f32[1,128], index: 6, kind: input, shape index: {}]
  %s7 = inlined_call_operand.vmem [shape: f32[256,128], index: 7, kind: output, shape index: {}]
  %s8 = sld [smem:[#allocation0]]
  $region61: #{fc_network_with_batchnorm.1} parent=0
    _
  %s10 = ssub.s32 1, %s8
  %s11 = scalar_select 0, %s10, %s8
  loop: start=0, step=1, limit=6
  $region2: #{fc_network_with_batchnorm.1} parent=0 // loop_pre_header
    _
  $region3: #{fc_network_with_batchnorm.1} parent=0 // loop_header
    %s13 = sphi 0, %s17
    %p14 = scmp.ge.s32.totalorder %s13, 6
    %s23 = sphi 0, %s25
    %s26 = sphi 0, %s23
    %s27 = sphi 0, %s26
    %s43 = sphi 0, %s27
    %s47 = sphi 0, %s47
    %s49 = sphi 0, %s47
    %s50 = sphi 0, %s49
    %s64 = sphi 0, %s50
    %s68 = sphi 0, %s68
    %s70 = sphi 0, %s68
    %s71 = sphi 0, %s70
    %s85 = sphi 0, %s71
    %s89 = sphi 0, %s89
    %s91 = sphi 0, %s89
    %s92 = sphi 0, %s91
    %s106 = sphi 0, %s92
    %s110 = sphi 0, %s110
    %s112 = sphi 0, %s110
    %s113 = sphi 0, %s112
    %s127 = sphi 0, %s113
    %s131 = sphi 0, %s131
    %s133 = sphi 0, %s131
    %s134 = sphi 0, %s133
    %s148 = sphi 0, %s134
    %s152 = sphi 0, %s152
    %s154 = sphi 0, %s152
    %s155 = sphi 0, %s154
    %s169 = sphi 0, %s155
    %s175 = sphi 0, %s177
    %s178 = sphi 0, %s175
    %s179 = sphi 0, %s178
    %s195 = sphi 0, %s179
  $region4: #{fc_network_with_batchnorm.1} parent=0 // loop_header_branch
    %16 = sbr.rel (%p14) target = $region8
  $region5: #{fc_network_with_batchnorm.1} parent=0 // loop_body
    %s18 = ssub.s32 %s13, 1
    %s19 = ssub.s32 %s13, 2
    %s20 = sadd.s32 %s13, 1
    %s21 = ssub.s32 %s13, %s20
    %p22 = scmp.eq.s32.totalorder %s21, 0
    %s24 = sadd.s32 %s23, 1
    %s25 = scalar_select %p22, %s23, %s24
    %p28 = pneg %p22
    %p29 = scmp.eq.s32.totalorder %s13, 3
    %p30 = por %p28, %p29
    %p31 = scmp.ne.s32.totalorder %s23, %s26
    %p32 = scmp.eq.s32.totalorder %s13, 0
    %p33 = por %p31, %p32
    %p34 = scmp.ne.s32.totalorder %s23, %s26
    %p35 = scmp.eq.s32.totalorder %s18, 3
    %p36 = por %p34, %p35
    %p37 = scmp.ne.s32.totalorder %s26, %s27
    %p38 = scmp.eq.s32.totalorder %s18, 0
    %p39 = por %p37, %p38
    %p40 = scmp.ne.s32.totalorder %s26, %s27
    %p41 = scmp.eq.s32.totalorder %s19, 3
    %p42 = por %p40, %p41
    %p44 = scmp.ne.s32.totalorder %s27, %s43
    %p45 = scmp.eq.s32.totalorder %s19, 0
    %p46 = por %p44, %p45
    %s48 = sadd.s32 %s47, 1
    %p51 = scmp.eq.s32.totalorder %s13, 3
    %p52 = scmp.ne.s32.totalorder %s47, %s49
    %p53 = scmp.eq.s32.totalorder %s13, 0
    %p54 = por %p52, %p53
    %p55 = scmp.ne.s32.totalorder %s47, %s49
    %p56 = scmp.eq.s32.totalorder %s18, 3
    %p57 = por %p55, %p56
    %p58 = scmp.ne.s32.totalorder %s49, %s50
    %p59 = scmp.eq.s32.totalorder %s18, 0
    %p60 = por %p58, %p59
    %p61 = scmp.ne.s32.totalorder %s49, %s50
    %p62 = scmp.eq.s32.totalorder %s19, 3
    %p63 = por %p61, %p62
    %p65 = scmp.ne.s32.totalorder %s50, %s64
    %p66 = scmp.eq.s32.totalorder %s19, 0
    %p67 = por %p65, %p66
    %s69 = sadd.s32 %s68, 1
    %p72 = scmp.eq.s32.totalorder %s13, 3
    %p73 = scmp.ne.s32.totalorder %s68, %s70
    %p74 = scmp.eq.s32.totalorder %s13, 0
    %p75 = por %p73, %p74
    %p76 = scmp.ne.s32.totalorder %s68, %s70
    %p77 = scmp.eq.s32.totalorder %s18, 3
    %p78 = por %p76, %p77
    %p79 = scmp.ne.s32.totalorder %s70, %s71
    %p80 = scmp.eq.s32.totalorder %s18, 0
    %p81 = por %p79, %p80
    %p82 = scmp.ne.s32.totalorder %s70, %s71
    %p83 = scmp.eq.s32.totalorder %s19, 3
    %p84 = por %p82, %p83
    %p86 = scmp.ne.s32.totalorder %s71, %s85
    %p87 = scmp.eq.s32.totalorder %s19, 0
    %p88 = por %p86, %p87
    %s90 = sadd.s32 %s89, 1
    %p93 = scmp.eq.s32.totalorder %s13, 3
    %p94 = scmp.ne.s32.totalorder %s89, %s91
    %p95 = scmp.eq.s32.totalorder %s13, 0
    %p96 = por %p94, %p95
    %p97 = scmp.ne.s32.totalorder %s89, %s91
    %p98 = scmp.eq.s32.totalorder %s18, 3
    %p99 = por %p97, %p98
    %p100 = scmp.ne.s32.totalorder %s91, %s92
    %p101 = scmp.eq.s32.totalorder %s18, 0
    %p102 = por %p100, %p101
    %p103 = scmp.ne.s32.totalorder %s91, %s92
    %p104 = scmp.eq.s32.totalorder %s19, 3
    %p105 = por %p103, %p104
    %p107 = scmp.ne.s32.totalorder %s92, %s106
    %p108 = scmp.eq.s32.totalorder %s19, 0
    %p109 = por %p107, %p108
    %s111 = sadd.s32 %s110, 1
    %p114 = scmp.eq.s32.totalorder %s13, 3
    %p115 = scmp.ne.s32.totalorder %s110, %s112
    %p116 = scmp.eq.s32.totalorder %s13, 0
    %p117 = por %p115, %p116
    %p118 = scmp.ne.s32.totalorder %s110, %s112
    %p119 = scmp.eq.s32.totalorder %s18, 3
    %p120 = por %p118, %p119
    %p121 = scmp.ne.s32.totalorder %s112, %s113
    %p122 = scmp.eq.s32.totalorder %s18, 0
    %p123 = por %p121, %p122
    %p124 = scmp.ne.s32.totalorder %s112, %s113
    %p125 = scmp.eq.s32.totalorder %s19, 3
    %p126 = por %p124, %p125
    %p128 = scmp.ne.s32.totalorder %s113, %s127
    %p129 = scmp.eq.s32.totalorder %s19, 0
    %p130 = por %p128, %p129
    %s132 = sadd.s32 %s131, 1
    %p135 = scmp.eq.s32.totalorder %s13, 3
    %p136 = scmp.ne.s32.totalorder %s131, %s133
    %p137 = scmp.eq.s32.totalorder %s13, 0
    %p138 = por %p136, %p137
    %p139 = scmp.ne.s32.totalorder %s131, %s133
    %p140 = scmp.eq.s32.totalorder %s18, 3
    %p141 = por %p139, %p140
    %p142 = scmp.ne.s32.totalorder %s133, %s134
    %p143 = scmp.eq.s32.totalorder %s18, 0
    %p144 = por %p142, %p143
    %p145 = scmp.ne.s32.totalorder %s133, %s134
    %p146 = scmp.eq.s32.totalorder %s19, 3
    %p147 = por %p145, %p146
    %p149 = scmp.ne.s32.totalorder %s134, %s148
    %p150 = scmp.eq.s32.totalorder %s19, 0
    %p151 = por %p149, %p150
    %s153 = sadd.s32 %s152, 1
    %p156 = scmp.eq.s32.totalorder %s13, 3
    %p157 = scmp.ne.s32.totalorder %s152, %s154
    %p158 = scmp.eq.s32.totalorder %s13, 0
    %p159 = por %p157, %p158
    %p160 = scmp.ne.s32.totalorder %s152, %s154
    %p161 = scmp.eq.s32.totalorder %s18, 3
    %p162 = por %p160, %p161
    %p163 = scmp.ne.s32.totalorder %s154, %s155
    %p164 = scmp.eq.s32.totalorder %s18, 0
    %p165 = por %p163, %p164
    %p166 = scmp.ne.s32.totalorder %s154, %s155
    %p167 = scmp.eq.s32.totalorder %s19, 3
    %p168 = por %p166, %p167
    %p170 = scmp.ne.s32.totalorder %s155, %s169
    %p171 = scmp.eq.s32.totalorder %s19, 0
    %p172 = por %p170, %p171
    %s173 = ssub.s32 %s13, %s20
    %p174 = scmp.eq.s32.totalorder %s173, 0
    %s176 = sadd.s32 %s175, 1
    %s177 = scalar_select %p174, %s175, %s176
    %p180 = pneg %p174
    %p181 = scmp.eq.s32.totalorder %s13, 3
    %p182 = por %p180, %p181
    %p183 = scmp.ne.s32.totalorder %s175, %s178
    %p184 = scmp.eq.s32.totalorder %s13, 0
    %p185 = por %p183, %p184
    %p186 = scmp.ne.s32.totalorder %s175, %s178
    %p187 = scmp.eq.s32.totalorder %s18, 3
    %p188 = por %p186, %p187
    %p189 = scmp.ne.s32.totalorder %s178, %s179
    %p190 = scmp.eq.s32.totalorder %s18, 0
    %p191 = por %p189, %p190
    %p192 = scmp.ne.s32.totalorder %s178, %s179
    %p193 = scmp.eq.s32.totalorder %s19, 3
    %p194 = por %p192, %p193
    %p196 = scmp.ne.s32.totalorder %s179, %s195
    %p197 = scmp.eq.s32.totalorder %s19, 0
    %p198 = por %p196, %p197
    %p199 = scmp.le.s32.totalorder 1, %s13
    %p200 = scmp.lt.s32.totalorder %s13, 5
    %p201 = pnand %p199, %p200
    %p202 = pneg %p201
    // Predicated region
    $region9: #{fc_network_with_batchnorm.1} parent=5 // pred_check
      _
    $region10: #{fc_network_with_batchnorm.1} parent=5 // pred_check_branch
      %204 = sbr.rel (%p201) target = $region12
    $region11: #{fc_network_with_batchnorm.1} parent=5 // pred_region
      %s205 = ssub.s32 %s13, 1
      // Predicated region
      $region13: #{fc_network_with_batchnorm.1} parent=11 // pred_check
        %p206 = pneg %p60
      $region14: #{fc_network_with_batchnorm.1} parent=11 // pred_check_branch
        %208 = sbr.rel (%p206) target = $region16
      $region15: #{fc_network_with_batchnorm.1} parent=11 // pred_region
        _
      $region16: #{fc_network_with_batchnorm.1} parent=11 // pred_fallthru
        _
      // Predicated region
      $region17: #{fc_network_with_batchnorm.1} parent=11 // pred_check
        %p209 = pneg %p81
      $region18: #{fc_network_with_batchnorm.1} parent=11 // pred_check_branch
        %211 = sbr.rel (%p209) target = $region20
      $region19: #{fc_network_with_batchnorm.1} parent=11 // pred_region
        _
      $region20: #{fc_network_with_batchnorm.1} parent=11 // pred_fallthru
        _
      // Predicated region
      $region21: #{fc_network_with_batchnorm.1} parent=11 // pred_check
        %p212 = pneg %p102
      $region22: #{fc_network_with_batchnorm.1} parent=11 // pred_check_branch
        %214 = sbr.rel (%p212) target = $region24
      $region23: #{fc_network_with_batchnorm.1} parent=11 // pred_region
        _
      $region24: #{fc_network_with_batchnorm.1} parent=11 // pred_fallthru
        _
      // Predicated region
      $region25: #{fc_network_with_batchnorm.1} parent=11 // pred_check
        %p215 = pneg %p123
      $region26: #{fc_network_with_batchnorm.1} parent=11 // pred_check_branch
        %217 = sbr.rel (%p215) target = $region28
      $region27: #{fc_network_with_batchnorm.1} parent=11 // pred_region
        _
      $region28: #{fc_network_with_batchnorm.1} parent=11 // pred_fallthru
        _
      // Predicated region
      $region29: #{fc_network_with_batchnorm.1} parent=11 // pred_check
        %p218 = pneg %p144
      $region30: #{fc_network_with_batchnorm.1} parent=11 // pred_check_branch
        %220 = sbr.rel (%p218) target = $region32
      $region31: #{fc_network_with_batchnorm.1} parent=11 // pred_region
        _
      $region32: #{fc_network_with_batchnorm.1} parent=11 // pred_fallthru
        _
      // Predicated region
      $region33: #{fc_network_with_batchnorm.1} parent=11 // pred_check
        %p221 = pneg %p165
      $region34: #{fc_network_with_batchnorm.1} parent=11 // pred_check_branch
        %223 = sbr.rel (%p221) target = $region36
      $region35: #{fc_network_with_batchnorm.1} parent=11 // pred_region
        _
      $region36: #{fc_network_with_batchnorm.1} parent=11 // pred_fallthru
        _
    $region12: #{fc_network_with_batchnorm.1} parent=5 // pred_fallthru
      _
    %p224 = scmp.lt.s32.totalorder %s13, 4
    // Predicated region
    $region37: #{fc_network_with_batchnorm.1} parent=5 // pred_check
      %p225 = pneg %p224
    $region38: #{fc_network_with_batchnorm.1} parent=5 // pred_check_branch
      %227 = sbr.rel (%p225) target = $region40
    $region39: #{fc_network_with_batchnorm.1} parent=5 // pred_region
      // Predicated region
      $region41: #{fc_network_with_batchnorm.1} parent=39 // pred_check
        %p228 = pneg %p33
      $region42: #{fc_network_with_batchnorm.1} parent=39 // pred_check_branch
        %230 = sbr.rel (%p228) target = $region44
      $region43: #{fc_network_with_batchnorm.1} parent=39 // pred_region
        %s231 = smul.u32 8, %s13
        %p232 = scmp.lt.s32.totalorder %s231, 31
        %s233 = scalar_select %p232, %s231, 31
        %s234 = smul.addr %s233, 8
        %s235 = scalar_lea.vmem %s0, %s234
        %s236 = smul.u32 8, %s13
      $region44: #{fc_network_with_batchnorm.1} parent=39 // pred_fallthru
        _
    $region40: #{fc_network_with_batchnorm.1} parent=5 // pred_fallthru
      _
    %p237 = scmp.le.s32.totalorder 1, %s13
    %p238 = scmp.lt.s32.totalorder %s13, 5
    %p239 = pnand %p237, %p238
    %p240 = pneg %p239
    // Predicated region
    $region45: #{fc_network_with_batchnorm.1} parent=5 // pred_check
      _
    $region46: #{fc_network_with_batchnorm.1} parent=5 // pred_check_branch
      %242 = sbr.rel (%p239) target = $region48
    $region47: #{fc_network_with_batchnorm.1} parent=5 // pred_region
      %s243 = ssub.s32 %s13, 1
      %s244 = smul.u32 8, %s18
      %p245 = scmp.lt.s32.totalorder %s244, 31
      %s246 = scalar_select %p245, %s244, 31
      %s247 = smul.addr %s246, 8
      %s248 = scalar_lea.vmem %s0, %s247
      %p249 = pneg %p39
      %p250 = pneg %p36
      %p251 = pneg %p60
      %p252 = pneg %p57
      %p253 = pneg %p81
      %p254 = pneg %p78
      %p255 = pneg %p102
      %p256 = pneg %p99
      %p257 = pneg %p123
      %p258 = pneg %p120
      %p259 = pneg %p144
      %p260 = pneg %p141
      %p261 = pneg %p165
      %p262 = pneg %p162
      %p263 = pneg %p191
      %p264 = pneg %p188
      %s265 = smul.u32 8, %s18
      %p266 = scmp.lt.s32.totalorder %s265, 31
      %s267 = scalar_select %p266, %s265, 31
      %s268 = smul.addr %s267, 8
      %s269 = scalar_lea.vmem %s7, %s268
      %s270 = smul.u32 8, %s18
      %p271 = scmp.lt.s32.totalorder %s270, 31
      %s272 = scalar_select %p271, %s270, 31
      %s273 = smul.addr %s272, 8
      %s274 = scalar_lea.vmem %s0, %s273
      %s275 = smul.u32 8, %s18
      %s276 = smul.u32 8, %s18
      %p277 = scmp.lt.s32.totalorder %s276, 31
      %s278 = scalar_select %p277, %s276, 31
      %s279 = smul.addr %s278, 8
      %s280 = scalar_lea.vmem %s7, %s279
      %s281 = smul.u32 8, %s18
      %v283 = vld [vmem:[%s274] sm:$0xff]
      %v284 = vld [vmem:[%s274 + $0x8] sm:$0xff]
      %v285 = vld [vmem:[%s274 + $0x10] sm:$0xff]
      %v286 = vld [vmem:[%s274 + $0x18] sm:$0xff]
      %v287 = vld [vmem:[%s274 + $0x20] sm:$0xff]
      %v288 = vld [vmem:[%s274 + $0x28] sm:$0xff]
      %v289 = vld [vmem:[%s274 + $0x30] sm:$0xff]
      %v290 = vld [vmem:[%s274 + $0x38] sm:$0xff]
      %v291 = vpack.c.bf16 %v284, %v283
      %v292 = vpack.c.bf16 %v286, %v285
      %v293 = vpack.c.bf16 %v288, %v287
      %v294 = vpack.c.bf16 %v290, %v289
      %v295 = vld [vmem:[%s1] sm:$0xf]
      %v296 = vld [vmem:[%s1 + $0x4] sm:$0xf]
      %v297 = vld [vmem:[%s2] sm:$0x1]
      %v299 = vlaneseq
      %v300 = vshrl.u32 %v299, 7
      %v301 = vsub.s32 0, %v300
      %v302 = vrot.slane %v297, %v301
      %v306 = vunpack.c.l.b16 %v295
      %v307 = vunpack.c.l.b16 %v296
      %v308 = vpack.c.b16 %v307, %v306
      %vm310 = vcmask 130048
      %v312 = vsel %vm310, %v291, 0
      %v315 = vsel %vm310, %v292, 0
      %v318 = vsel %vm310, %v293, 0
      %v321 = vsel %vm310, %v294, 0
      %323 = vmatprep.subr.bf16.mxu0 0
      %324 = vmatpush1.bf16.msra.mxu0 %v308
      %325 = vmatprep.subr.bf16.mxu0 0
      %326 = vmatpush1.bf16.msra.mxu0 0
      %327 = vmatprep.subr.bf16.mxu0 0
      %328 = vmatpush1.bf16.msra.mxu0 0
      %329 = vmatprep.subr.bf16.mxu0 0
      %330 = vmatpush1.bf16.msra.mxu0 0
      %331 = vmatprep.subr.bf16.mxu0 0
      %332 = vmatpush1.bf16.msra.mxu0 0
      %333 = vmatprep.subr.bf16.mxu0 0
      %334 = vmatpush1.bf16.msra.mxu0 0
      %335 = vmatprep.subr.bf16.mxu0 0
      %336 = vmatpush1.bf16.msra.mxu0 0
      %337 = vmatprep.subr.bf16.mxu0 0
      %338 = vmatpush1.bf16.msra.mxu0 0
      %339 = vmatprep.subr.bf16.mxu0 0
      %340 = vmatpush1.bf16.msra.mxu0 0
      %341 = vmatprep.subr.bf16.mxu0 0
      %342 = vmatpush1.bf16.msra.mxu0 0
      %343 = vmatprep.subr.bf16.mxu0 0
      %344 = vmatpush1.bf16.msra.mxu0 0
      %345 = vmatprep.subr.bf16.mxu0 0
      %346 = vmatpush1.bf16.msra.mxu0 0
      %347 = vmatprep.subr.bf16.mxu0 0
      %348 = vmatpush1.bf16.msra.mxu0 0
      %349 = vmatprep.subr.bf16.mxu0 0
      %350 = vmatpush1.bf16.msra.mxu0 0
      %351 = vmatprep.subr.bf16.mxu0 0
      %352 = vmatpush1.bf16.msra.mxu0 0
      %353 = vmatprep.subr.bf16.mxu0 0
      %354 = vmatpush1.bf16.msra.mxu0 0
      %355 = vmatprep.mubr.bf16.mxu0 0
      %356 = vmatmul.mubr.bf16.gmra.mrb[0].mxu0 %v312
      %v357 = vpop.f32.mrb[0].mxu0
      %v358 = vadd.f32 %v302, %v357
      %v359 = vpop.f32.mrb[0].mxu0
      %v360 = vpop.f32.mrb[0].mxu0
      %v361 = vadd.f32 %v302, %v360
      %v362 = vpop.f32.mrb[0].mxu0
      %363 = vmatprep.mubr.bf16.mxu0 0
      %364 = vmatmul.mubr.bf16.gmra.mrb[0].mxu0 %v315
      %v365 = vpop.f32.mrb[0].mxu0
      %v366 = vadd.f32 %v302, %v365
      %v367 = vpop.f32.mrb[0].mxu0
      %v368 = vpop.f32.mrb[0].mxu0
      %v369 = vadd.f32 %v302, %v368
      %v370 = vpop.f32.mrb[0].mxu0
      %371 = vmatprep.mubr.bf16.mxu0 0
      %372 = vmatmul.mubr.bf16.gmra.mrb[0].mxu0 %v318
      %v373 = vpop.f32.mrb[0].mxu0
      %v374 = vadd.f32 %v302, %v373
      %v375 = vpop.f32.mrb[0].mxu0
      %v376 = vpop.f32.mrb[0].mxu0
      %v377 = vadd.f32 %v302, %v376
      %v378 = vpop.f32.mrb[0].mxu0
      %379 = vmatprep.mubr.bf16.mxu0 0
      %380 = vmatmul.mubr.bf16.gmra.mrb[0].mxu0 %v321
      %v381 = vpop.f32.mrb[0].mxu0
      %v382 = vadd.f32 %v302, %v381
      %v383 = vpop.f32.mrb[0].mxu0
      %v384 = vpop.f32.mrb[0].mxu0
      %v385 = vadd.f32 %v302, %v384
      %v386 = vpop.f32.mrb[0].mxu0
      %387 = vdwg.mxu0
      %v388 = vmax.f32 %v358, 0.0
      %v389 = vmax.f32 %v361, 0.0
      %v390 = vmax.f32 %v366, 0.0
      %v391 = vmax.f32 %v369, 0.0
      %v392 = vmax.f32 %v374, 0.0
      %v393 = vmax.f32 %v377, 0.0
      %v394 = vmax.f32 %v382, 0.0
      %v395 = vmax.f32 %v385, 0.0
      %v396 = vpack.c.bf16 %v389, %v388
      %v397 = vpack.c.bf16 %v391, %v390
      %v398 = vpack.c.bf16 %v393, %v392
      %v399 = vpack.c.bf16 %v395, %v394
      %v400 = vld [vmem:[%s3] sm:$0xf]
      %v401 = vld [vmem:[%s3 + $0x4] sm:$0xf]
      %v402 = vld [vmem:[%s3 + $0x8] sm:$0xf]
      %v403 = vld [vmem:[%s3 + $0xc] sm:$0xf]
      %v404 = vld [vmem:[%s3 + $0x10] sm:$0xf]
      %v405 = vld [vmem:[%s3 + $0x14] sm:$0xf]
      %v406 = vld [vmem:[%s3 + $0x18] sm:$0xf]
      %v407 = vld [vmem:[%s3 + $0x1c] sm:$0xf]
      %v408 = vld [vmem:[%s4] sm:$0x1]
      %v410 = vlaneseq
      %v411 = vshrl.u32 %v410, 7
      %v412 = vsub.s32 0, %v411
      %v413 = vrot.slane %v408, %v412
      %v423 = vunpack.c.l.b16 %v400
      %v424 = vunpack.c.l.b16 %v401
      %v425 = vunpack.c.l.b16 %v402
      %v426 = vunpack.c.l.b16 %v403
      %v427 = vunpack.c.l.b16 %v404
      %v428 = vunpack.c.l.b16 %v405
      %v429 = vunpack.c.l.b16 %v406
      %v430 = vunpack.c.l.b16 %v407
      %v431 = vpack.c.b16 %v424, %v423
      %v432 = vpack.c.b16 %v426, %v425
      %v433 = vpack.c.b16 %v428, %v427
      %v434 = vpack.c.b16 %v430, %v429
      %vm439 = vcmask 523264
      %v441 = vsel %vm439, %v396, 0
      %v444 = vsel %vm439, %v397, 0
      %v447 = vsel %vm439, %v398, 0
      %v450 = vsel %vm439, %v399, 0
      %452 = vmatprep.subr.bf16.mxu0 0
      %453 = vmatpush1.bf16.msra.mxu0 %v431
      %454 = vmatprep.subr.bf16.mxu0 0
      %455 = vmatpush1.bf16.msra.mxu0 %v432
      %456 = vmatprep.subr.bf16.mxu0 0
      %457 = vmatpush1.bf16.msra.mxu0 %v433
      %458 = vmatprep.subr.bf16.mxu0 0
      %459 = vmatpush1.bf16.msra.mxu0 %v434
      %460 = vmatprep.subr.bf16.mxu0 0
      %461 = vmatpush1.bf16.msra.mxu0 0
      %462 = vmatprep.subr.bf16.mxu0 0
      %463 = vmatpush1.bf16.msra.mxu0 0
      %464 = vmatprep.subr.bf16.mxu0 0
      %465 = vmatpush1.bf16.msra.mxu0 0
      %466 = vmatprep.subr.bf16.mxu0 0
      %467 = vmatpush1.bf16.msra.mxu0 0
      %468 = vmatprep.subr.bf16.mxu0 0
      %469 = vmatpush1.bf16.msra.mxu0 0
      %470 = vmatprep.subr.bf16.mxu0 0
      %471 = vmatpush1.bf16.msra.mxu0 0
      %472 = vmatprep.subr.bf16.mxu0 0
      %473 = vmatpush1.bf16.msra.mxu0 0
      %474 = vmatprep.subr.bf16.mxu0 0
      %475 = vmatpush1.bf16.msra.mxu0 0
      %476 = vmatprep.subr.bf16.mxu0 0
      %477 = vmatpush1.bf16.msra.mxu0 0
      %478 = vmatprep.subr.bf16.mxu0 0
      %479 = vmatpush1.bf16.msra.mxu0 0
      %480 = vmatprep.subr.bf16.mxu0 0
      %481 = vmatpush1.bf16.msra.mxu0 0
      %482 = vmatprep.subr.bf16.mxu0 0
      %483 = vmatpush1.bf16.msra.mxu0 0
      %484 = vmatprep.mubr.bf16.mxu0 0
      %485 = vmatmul.mubr.bf16.gmra.mrb[0].mxu0 %v441
      %v486 = vpop.f32.mrb[0].mxu0
      %v487 = vadd.f32 %v413, %v486
      %v488 = vpop.f32.mrb[0].mxu0
      %v489 = vpop.f32.mrb[0].mxu0
      %v490 = vadd.f32 %v413, %v489
      %v491 = vpop.f32.mrb[0].mxu0
      %492 = vmatprep.mubr.bf16.mxu0 0
      %493 = vmatmul.mubr.bf16.gmra.mrb[0].mxu0 %v444
      %v494 = vpop.f32.mrb[0].mxu0
      %v495 = vadd.f32 %v413, %v494
      %v496 = vpop.f32.mrb[0].mxu0
      %v497 = vpop.f32.mrb[0].mxu0
      %v498 = vadd.f32 %v413, %v497
      %v499 = vpop.f32.mrb[0].mxu0
      %500 = vmatprep.mubr.bf16.mxu0 0
      %501 = vmatmul.mubr.bf16.gmra.mrb[0].mxu0 %v447
      %v502 = vpop.f32.mrb[0].mxu0
      %v503 = vadd.f32 %v413, %v502
      %v504 = vpop.f32.mrb[0].mxu0
      %v505 = vpop.f32.mrb[0].mxu0
      %v506 = vadd.f32 %v413, %v505
      %v507 = vpop.f32.mrb[0].mxu0
      %508 = vmatprep.mubr.bf16.mxu0 0
      %509 = vmatmul.mubr.bf16.gmra.mrb[0].mxu0 %v450
      %v510 = vpop.f32.mrb[0].mxu0
      %v511 = vadd.f32 %v413, %v510
      %v512 = vpop.f32.mrb[0].mxu0
      %v513 = vpop.f32.mrb[0].mxu0
      %v514 = vadd.f32 %v413, %v513
      %v515 = vpop.f32.mrb[0].mxu0
      %516 = vdwg.mxu0
      %v517 = vmax.f32 %v487, 0.0
      %v518 = vmax.f32 %v490, 0.0
      %v519 = vmax.f32 %v495, 0.0
      %v520 = vmax.f32 %v498, 0.0
      %v521 = vmax.f32 %v503, 0.0
      %v522 = vmax.f32 %v506, 0.0
      %v523 = vmax.f32 %v511, 0.0
      %v524 = vmax.f32 %v514, 0.0
      %v525 = vpack.c.bf16 %v518, %v517
      %v526 = vpack.c.bf16 %v520, %v519
      %v527 = vpack.c.bf16 %v522, %v521
      %v528 = vpack.c.bf16 %v524, %v523
      %v529 = vld [vmem:[%s5] sm:$0xf]
      %v530 = vld [vmem:[%s5 + $0x4] sm:$0xf]
      %v531 = vld [vmem:[%s5 + $0x8] sm:$0xf]
      %v532 = vld [vmem:[%s5 + $0xc] sm:$0xf]
      %v533 = vld [vmem:[%s5 + $0x10] sm:$0xf]
      %v534 = vld [vmem:[%s5 + $0x14] sm:$0xf]
      %v535 = vld [vmem:[%s5 + $0x18] sm:$0xf]
      %v536 = vld [vmem:[%s5 + $0x1c] sm:$0xf]
      %v537 = vld [vmem:[%s6] sm:$0x1]
      %v539 = vlaneseq
      %v540 = vshrl.u32 %v539, 7
      %v541 = vsub.s32 0, %v540
      %v542 = vrot.slane %v537, %v541
      %v552 = vunpack.c.l.b16 %v529
      %v553 = vunpack.c.l.b16 %v530
      %v554 = vunpack.c.l.b16 %v531
      %v555 = vunpack.c.l.b16 %v532
      %v556 = vunpack.c.l.b16 %v533
      %v557 = vunpack.c.l.b16 %v534
      %v558 = vunpack.c.l.b16 %v535
      %v559 = vunpack.c.l.b16 %v536
      %v560 = vpack.c.b16 %v553, %v552
      %v561 = vpack.c.b16 %v555, %v554
      %v562 = vpack.c.b16 %v557, %v556
      %v563 = vpack.c.b16 %v559, %v558
      %v569 = vsel %vm439, %v525, 0
      %v572 = vsel %vm439, %v526, 0
      %v575 = vsel %vm439, %v527, 0
      %v578 = vsel %vm439, %v528, 0
      %580 = vmatprep.subr.bf16.mxu0 0
      %581 = vmatpush1.bf16.msra.mxu0 %v560
      %582 = vmatprep.subr.bf16.mxu0 0
      %583 = vmatpush1.bf16.msra.mxu0 %v561
      %584 = vmatprep.subr.bf16.mxu0 0
      %585 = vmatpush1.bf16.msra.mxu0 %v562
      %586 = vmatprep.subr.bf16.mxu0 0
      %587 = vmatpush1.bf16.msra.mxu0 %v563
      %588 = vmatprep.subr.bf16.mxu0 0
      %589 = vmatpush1.bf16.msra.mxu0 0
      %590 = vmatprep.subr.bf16.mxu0 0
      %591 = vmatpush1.bf16.msra.mxu0 0
      %592 = vmatprep.subr.bf16.mxu0 0
      %593 = vmatpush1.bf16.msra.mxu0 0
      %594 = vmatprep.subr.bf16.mxu0 0
      %595 = vmatpush1.bf16.msra.mxu0 0
      %596 = vmatprep.subr.bf16.mxu0 0
      %597 = vmatpush1.bf16.msra.mxu0 0
      %598 = vmatprep.subr.bf16.mxu0 0
      %599 = vmatpush1.bf16.msra.mxu0 0
      %600 = vmatprep.subr.bf16.mxu0 0
      %601 = vmatpush1.bf16.msra.mxu0 0
      %602 = vmatprep.subr.bf16.mxu0 0
      %603 = vmatpush1.bf16.msra.mxu0 0
      %604 = vmatprep.subr.bf16.mxu0 0
      %605 = vmatpush1.bf16.msra.mxu0 0
      %606 = vmatprep.subr.bf16.mxu0 0
      %607 = vmatpush1.bf16.msra.mxu0 0
      %608 = vmatprep.subr.bf16.mxu0 0
      %609 = vmatpush1.bf16.msra.mxu0 0
      %610 = vmatprep.subr.bf16.mxu0 0
      %611 = vmatpush1.bf16.msra.mxu0 0
      %612 = vmatprep.mubr.bf16.mxu0 0
      %613 = vmatmul.mubr.bf16.gmra.mrb[0].mxu0 %v569
      %v614 = vpop.f32.mrb[0].mxu0
      %v615 = vadd.f32 %v542, %v614
      %v616 = vpop.f32.mrb[0].mxu0
      %v617 = vpop.f32.mrb[0].mxu0
      %v618 = vadd.f32 %v542, %v617
      %v619 = vpop.f32.mrb[0].mxu0
      %620 = vmatprep.mubr.bf16.mxu0 0
      %621 = vmatmul.mubr.bf16.gmra.mrb[0].mxu0 %v572
      %v622 = vpop.f32.mrb[0].mxu0
      %v623 = vadd.f32 %v542, %v622
      %v624 = vpop.f32.mrb[0].mxu0
      %v625 = vpop.f32.mrb[0].mxu0
      %v626 = vadd.f32 %v542, %v625
      %v627 = vpop.f32.mrb[0].mxu0
      %628 = vmatprep.mubr.bf16.mxu0 0
      %629 = vmatmul.mubr.bf16.gmra.mrb[0].mxu0 %v575
      %v630 = vpop.f32.mrb[0].mxu0
      %v631 = vadd.f32 %v542, %v630
      %v632 = vpop.f32.mrb[0].mxu0
      %v633 = vpop.f32.mrb[0].mxu0
      %v634 = vadd.f32 %v542, %v633
      %v635 = vpop.f32.mrb[0].mxu0
      %636 = vmatprep.mubr.bf16.mxu0 0
      %637 = vmatmul.mubr.bf16.gmra.mrb[0].mxu0 %v578
      %v638 = vpop.f32.mrb[0].mxu0
      %v639 = vadd.f32 %v542, %v638
      %v640 = vpop.f32.mrb[0].mxu0
      %v641 = vpop.f32.mrb[0].mxu0
      %v642 = vadd.f32 %v542, %v641
      %v643 = vpop.f32.mrb[0].mxu0
      %644 = vdwg.mxu0
      %645 = vst [vmem:[%s280] sm:$0xff] %v615
      %646 = vst [vmem:[%s280 + $0x8] sm:$0xff] %v618
      %647 = vst [vmem:[%s280 + $0x10] sm:$0xff] %v623
      %648 = vst [vmem:[%s280 + $0x18] sm:$0xff] %v626
      %649 = vst [vmem:[%s280 + $0x20] sm:$0xff] %v631
      %650 = vst [vmem:[%s280 + $0x28] sm:$0xff] %v634
      %651 = vst [vmem:[%s280 + $0x30] sm:$0xff] %v639
      %652 = vst [vmem:[%s280 + $0x38] sm:$0xff] %v642
      %s653 = smul.u32 8, %s18
      %p654 = scmp.lt.s32.totalorder %s653, 31
      %s655 = scalar_select %p654, %s653, 31
      %s656 = smul.addr %s655, 8
      %s657 = scalar_lea.vmem %s7, %s656
      // Predicated region
      $region49: #{fc_network_with_batchnorm.1} parent=47 // pred_check
        %p658 = pneg %p188
      $region50: #{fc_network_with_batchnorm.1} parent=47 // pred_check_branch
        %660 = sbr.rel (%p658) target = $region52
      $region51: #{fc_network_with_batchnorm.1} parent=47 // pred_region
        %s661 = smul.u32 8, %s18
      $region52: #{fc_network_with_batchnorm.1} parent=47 // pred_fallthru
        _
    $region48: #{fc_network_with_batchnorm.1} parent=5 // pred_fallthru
      _
    %p662 = scmp.le.s32.totalorder 2, %s13
    // Predicated region
    $region53: #{fc_network_with_batchnorm.1} parent=5 // pred_check
      %p663 = pneg %p662
    $region54: #{fc_network_with_batchnorm.1} parent=5 // pred_check_branch
      %665 = sbr.rel (%p663) target = $region56
    $region55: #{fc_network_with_batchnorm.1} parent=5 // pred_region
      %s666 = ssub.s32 %s13, 2
      // Predicated region
      $region57: #{fc_network_with_batchnorm.1} parent=55 // pred_check
        %p667 = pneg %p194
      $region58: #{fc_network_with_batchnorm.1} parent=55 // pred_check_branch
        %669 = sbr.rel (%p667) target = $region60
      $region59: #{fc_network_with_batchnorm.1} parent=55 // pred_region
        %s670 = smul.u32 8, %s19
        %p671 = scmp.lt.s32.totalorder %s670, 31
        %s672 = scalar_select %p671, %s670, 31
        %s673 = smul.addr %s672, 8
        %s674 = scalar_lea.vmem %s7, %s673
      $region60: #{fc_network_with_batchnorm.1} parent=55 // pred_fallthru
        _
    $region56: #{fc_network_with_batchnorm.1} parent=5 // pred_fallthru
      _
  $region6: #{fc_network_with_batchnorm.1} parent=0 // loop_footer
    %s17 = sadd.s32 1, %s13
  $region7: #{fc_network_with_batchnorm.1} parent=0 // loop_footer_branch
    %12 = sbr.rel target = $region3
  $region8: #{fc_network_with_batchnorm.1} parent=0 // loop_exit
    _

</llo_original>
